<compile_context>
chip_gen: v5e
topology: v5e:2x2
jax: 0.10.0
libtpu: 0.0.40
codegen_flags: <defaults>
</compile_context>

<pallas_src>
import functools

import jax
import jax.numpy as jnp
from jax import lax
from jax.experimental import pallas as pl
from jax.experimental.pallas import tpu as pltpu


def _round_up(x, m):
    return (x + m - 1) // m * m


def _device_kind():
    try:
        return jax.devices()[0].device_kind.lower()
    except Exception:
        return ""


def _supports_bf16_transcendentals():
    """True on TPU generations with a bf16 EUP/VPU (v6e, v7x); False on <= v5."""
    kind = _device_kind()
    if not kind:
        return False
    return not any(v in kind for v in ("v2", "v3", "v4", "v5"))


def _tensorcores_per_chip():
    """2 on megacore / dual-TC chips (v4, v7x); 1 otherwise (v5e, v6e)."""
    kind = _device_kind()
    if any(v in kind for v in ("v4", "v7", "7x")):
        return 2
    return 1


def _dsdh_kernel(ub_ref, u_ref, st_ref, out_ref, *, n_train, tile_n,
                 tiles_per_split, mask_needed, softplus_dtype):
    c = pl.program_id(0)          # parallel split of n_train (one per TC)
    k = pl.program_id(1)          # tile index inside the split (reduction axis)

    @pl.when(k == 0)
    def _init():
        out_ref[0, 0] = jnp.float32(0.0)

    # Fold the *0.5 into the tiny resident (bit, batch) operand instead of the
    # (batch, TN) streamed tile.
    ub_half = ub_ref[...] * jnp.float32(0.5)          # (bit, batch)
    u = u_ref[...]                                    # (bit, TN)
    s_t = st_ref[...]                                 # (batch, TN)

    # inner^T tile: (batch, TN) = contract over `bit` (axis 0 of both operands).
    inner = lax.dot_general(
        ub_half, u,
        dimension_numbers=(((0,), (0,)), ((), ())),
        preferred_element_type=jnp.float32,
    )
    inner = jnp.clip(inner, -100.0, 50.0)

    # softplus = log(1 + exp(inner)); optionally bf16 on v6e/v7x for EUP
    # throughput.  The S*inner term and the accumulation stay in f32.
    x = inner.astype(softplus_dtype)
    softplus = jnp.log(1.0 + jnp.exp(x)).astype(jnp.float32)
    lik = softplus - s_t * inner                      # (batch, TN), f32

    if mask_needed:
        # Zero padded n_train columns so the mean divisor stays exact.
        col0 = (c * tiles_per_split + k) * tile_n
        cols = col0 + lax.broadcasted_iota(jnp.int32, lik.shape, 1)
        lik = jnp.where(cols < n_train, lik, 0.0)

    # Lane-axis (XLU) reduction first, then sublanes, then scalar accumulate.
    partial = jnp.sum(jnp.sum(lik, axis=1, keepdims=True))
    out_ref[0, 0] += partial


def dsdh_loss(U_batch, U, S, B, eta, *, tile_n=1024, use_bf16_softplus=None):
    """Pallas implementation of DSDH_loss.forward; returns a scalar float32."""
    U_batch = jnp.asarray(U_batch, jnp.float32)
    U = jnp.asarray(U, jnp.float32)
    S = jnp.asarray(S, jnp.float32)
    B = jnp.asarray(B, jnp.float32)

    bit, batch = U_batch.shape
    n_train = U.shape[1]
    assert U.shape == (bit, n_train)
    assert S.shape == (n_train, batch)
    assert B.shape == (bit, batch)

    if use_bf16_softplus is None:
        use_bf16_softplus = _supports_bf16_transcendentals()
    softplus_dtype = jnp.bfloat16 if use_bf16_softplus else jnp.float32

    # ---- tiling over n_train (the lane axis of the streamed tiles) ---------
    # Cap the tile so 2x double-buffered streamed tiles + a handful of
    # (batch, tile_n) f32 intermediates stay well inside the scoped VMEM limit.
    vmem_budget = 24 << 20
    per_col_bytes = 4 * (2 * bit + 2 * batch + 8 * batch)   # streamed + live f32
    cap = max(128, (vmem_budget // max(per_col_bytes, 1)) // 128 * 128)
    tile_n = max(128, min(tile_n, cap))
    tile_n = _round_up(min(tile_n, _round_up(n_train, 128)), 128)

    tiles_total = pl.cdiv(n_train, tile_n)
    # One split per TensorCore on dual-TC chips; one split elsewhere so no
    # fully-padded tiles are wasted on a serial loop.
    num_splits = 2 if (_tensorcores_per_chip() == 2 and tiles_total >= 2) else 1
    tiles_per_split = pl.cdiv(tiles_total, num_splits)
    n_pad = num_splits * tiles_per_split * tile_n
    mask_needed = n_pad != n_train

    # Lane-dense layout: stream S as S^T so n_train is the last (lane) axis.
    S_t = S.T                                    # (batch, n_train)
    if mask_needed:
        pad = n_pad - n_train
        U_p = jnp.pad(U, ((0, 0), (0, pad)))
        S_t = jnp.pad(S_t, ((0, 0), (0, pad)))
    else:
        U_p = U

    grid = (num_splits, tiles_per_split)

    def _tile_map(c, k):
        return (0, c * tiles_per_split + k)

    kernel = functools.partial(
        _dsdh_kernel,
        n_train=n_train,
        tile_n=tile_n,
        tiles_per_split=tiles_per_split,
        mask_needed=mask_needed,
        softplus_dtype=softplus_dtype,
    )

    # VMEM budget: double-buffered U / S^T tiles + resident U_batch + a few
    # (batch, tile_n) f32 intermediates, with headroom; capped for v7x (64 MiB).
    est = 4 * (2 * bit * tile_n + 2 * batch * tile_n + 2 * bit * batch
               + 8 * batch * tile_n)
    vmem_limit = int(min(max(est + (4 << 20), 16 << 20), 48 << 20))

    cost = pl.CostEstimate(
        flops=2 * bit * n_train * batch + 6 * n_train * batch,
        transcendentals=2 * n_train * batch,
        bytes_accessed=4 * (bit * n_train + n_train * batch + bit * batch),
    )

    partials = pl.pallas_call(
        kernel,
        out_shape=jax.ShapeDtypeStruct((num_splits, 1), jnp.float32),
        grid=grid,
        in_specs=[
            pl.BlockSpec((bit, batch), lambda c, k: (0, 0)),    # U_batch (resident)
            pl.BlockSpec((bit, tile_n), _tile_map),             # U tile
            pl.BlockSpec((batch, tile_n), _tile_map),           # S^T tile
        ],
        out_specs=pl.BlockSpec((1, 1), lambda c, k: (c, 0),
                               memory_space=pltpu.MemorySpace.SMEM),
        compiler_params=pltpu.CompilerParams(
            dimension_semantics=("parallel", "arbitrary"),
            vmem_limit_bytes=vmem_limit,
        ),
        cost_estimate=cost,
    )(U_batch, U_p, S_t)

    likelihood_loss = jnp.sum(partials) / jnp.float32(n_train * batch)
    # Tiny (bit, batch) regulariser: cheaper in plain JAX than per-grid-step.
    reg_loss = jnp.mean((B - U_batch) ** 2)
    return likelihood_loss + jnp.float32(eta) * reg_loss


def _reference(U_batch, U, S, B, eta):
    inner = (U.T @ U_batch) * 0.5
    inner = jnp.clip(inner, -100.0, 50.0)
    ll = jnp.log(1.0 + jnp.exp(inner)) - S * inner
    return jnp.mean(ll) + eta * jnp.mean((B - U_batch) ** 2)


if __name__ == "__main__":
    # Small, deterministic example shapes consistent with the module.
    bit = 32          # hash code length (module's `bit`)
    batch = 8         # current batch size
    n_train = 2000    # training samples; exercises multi-tile grid + masking
    eta = 0.1         # module's `eta`

    key = jax.random.PRNGKey(0)
    k1, k2, k3 = jax.random.split(key, 3)

    U_batch = jax.random.normal(k1, (bit, batch), dtype=jnp.float32)
    U = jax.random.normal(k2, (bit, n_train), dtype=jnp.float32)
    S = (jax.random.uniform(k3, (n_train, batch)) > 0.5).astype(jnp.float32)
    B = jnp.sign(U_batch)

    ref = _reference(U_batch, U, S, B, eta)

    # Strict check with the exact-f32 softplus path.
    loss_f32 = dsdh_loss(U_batch, U, S, B, eta, use_bf16_softplus=False)
    loss_f32 = jax.block_until_ready(loss_f32)
    assert jnp.allclose(loss_f32, ref, rtol=1e-4, atol=1e-4), (loss_f32, ref)

    # Default path (bf16 softplus on v6e/v7x, f32 elsewhere): looser tolerance.
    loss = dsdh_loss(U_batch, U, S, B, eta)
    loss = jax.block_until_ready(loss)
    assert jnp.allclose(loss, ref, rtol=2e-2, atol=2e-2), (loss, ref)

    print("KERNEL_OK")
</pallas_src>

<mosaic_0001>
module attributes {stable_mosaic.version = 11 : i64} {
  func.func @_dsdh_kernel(%arg0: i32, %arg1: i32, %arg2: memref<32x8xf32, #tpu.memory_space<vmem>>, %arg3: memref<32x1024xf32, #tpu.memory_space<vmem>>, %arg4: memref<8x1024xf32, #tpu.memory_space<vmem>>, %arg5: memref<1x1xf32, #tpu.memory_space<smem>>) attributes {dimension_semantics = [#tpu.dimension_semantics<parallel>, #tpu.dimension_semantics<arbitrary>], iteration_bounds = array<i64: 1, 2>, scalar_prefetch = 0 : i64, scratch_operands = 0 : i64, tpu.core_type = #tpu.core_type<tc>, window_params = [{pipeline_mode = #tpu.pipeline_mode<synchronous>, transform_indices = @transform_0, window_bounds = array<i64: 32, 8>}, {transform_indices = @transform_1, window_bounds = array<i64: 32, 1024>}, {transform_indices = @transform_2, window_bounds = array<i64: 8, 1024>}, {transform_indices = @transform_3, window_bounds = array<i64: 1, 1>}]} {
    %c0_i32 = arith.constant 0 : i32
    %0 = arith.cmpi eq, %arg1, %c0_i32 : i32
    %1 = arith.extui %0 : i1 to i32
    %c0_i32_0 = arith.constant 0 : i32
    %2 = arith.cmpi ne, %1, %c0_i32_0 : i32
    scf.if %2 {
      %cst_17 = arith.constant 0.000000e+00 : f32
      %c0_18 = arith.constant 0 : index
      %c0_19 = arith.constant 0 : index
      %38 = memref.load %arg5[%c0_18, %c0_19] : memref<1x1xf32, #tpu.memory_space<smem>>
      memref.store %cst_17, %arg5[%c0_18, %c0_19] : memref<1x1xf32, #tpu.memory_space<smem>>
    } else {
    }
    %c0 = arith.constant 0 : index
    %c0_1 = arith.constant 0 : index
    %3 = vector.load %arg2[%c0, %c0_1] : memref<32x8xf32, #tpu.memory_space<vmem>>, vector<32x8xf32>
    %cst = arith.constant 5.000000e-01 : f32
    %4 = vector.broadcast %cst : f32 to vector<32x8xf32>
    %5 = arith.mulf %3, %4 : vector<32x8xf32>
    %c0_2 = arith.constant 0 : index
    %c0_3 = arith.constant 0 : index
    %6 = vector.load %arg3[%c0_2, %c0_3] : memref<32x1024xf32, #tpu.memory_space<vmem>>, vector<32x1024xf32>
    %c0_4 = arith.constant 0 : index
    %c0_5 = arith.constant 0 : index
    %7 = vector.load %arg4[%c0_4, %c0_5] : memref<8x1024xf32, #tpu.memory_space<vmem>>, vector<8x1024xf32>
    %cst_6 = arith.constant dense<0.000000e+00> : vector<8x1024xf32>
    %8 = tpu.matmul %5, %6, %cst_6 {dimension_numbers = #tpu.dot_dimension_numbers<[0], [0], [1], [1], [0, 1, 1, 1], [], []>} : vector<32x8xf32>, vector<32x1024xf32>, vector<8x1024xf32> -> vector<8x1024xf32>
    %cst_7 = arith.constant -1.000000e+02 : f32
    %cst_8 = arith.constant 5.000000e+01 : f32
    %9 = vector.broadcast %cst_7 : f32 to vector<8x1024xf32>
    %10 = arith.maximumf %9, %8 : vector<8x1024xf32>
    %11 = vector.broadcast %cst_8 : f32 to vector<8x1024xf32>
    %12 = arith.minimumf %11, %10 : vector<8x1024xf32>
    %13 = math.exp %12 : vector<8x1024xf32>
    %cst_9 = arith.constant 1.000000e+00 : f32
    %14 = vector.broadcast %cst_9 : f32 to vector<8x1024xf32>
    %15 = arith.addf %14, %13 : vector<8x1024xf32>
    %16 = math.log %15 : vector<8x1024xf32>
    %17 = arith.mulf %7, %12 : vector<8x1024xf32>
    %18 = arith.subf %16, %17 : vector<8x1024xf32>
    %c2_i32 = arith.constant 2 : i32
    %19 = arith.muli %arg0, %c2_i32 : i32
    %20 = arith.addi %19, %arg1 : i32
    %c1024_i32 = arith.constant 1024 : i32
    %21 = arith.muli %20, %c1024_i32 : i32
    %22 = tpu.iota {dimensions = array<i32: 1>} : vector<8x1024xi32>
    %23 = vector.broadcast %21 : i32 to vector<8x1024xi32>
    %24 = arith.addi %23, %22 : vector<8x1024xi32>
    %c2000_i32 = arith.constant 2000 : i32
    %25 = vector.broadcast %c2000_i32 : i32 to vector<8x1024xi32>
    %26 = arith.cmpi slt, %24, %25 : vector<8x1024xi32>
    %cst_10 = arith.constant 0.000000e+00 : f32
    %27 = vector.broadcast %cst_10 : f32 to vector<8x1024xf32>
    %28 = arith.select %26, %18, %27 : vector<8x1024xi1>, vector<8x1024xf32>
    %cst_11 = arith.constant dense<0.000000e+00> : vector<8xf32>
    %29 = vector.multi_reduction <add>, %28, %cst_11 [1] : vector<8x1024xf32> to vector<8xf32>
    %30 = vector.shape_cast %29 : vector<8xf32> to vector<8x1xf32>
    %31 = vector.shape_cast %30 : vector<8x1xf32> to vector<1x8x1xf32>
    %cst_12 = arith.constant dense<0.000000e+00> : vector<1xf32>
    %32 = vector.multi_reduction <add>, %31, %cst_12 [1, 2] : vector<1x8x1xf32> to vector<1xf32>
    %33 = vector.shape_cast %32 : vector<1xf32> to vector<1x1x1xf32>
    %34 = vector.extract %33[0, 0, 0] : f32 from vector<1x1x1xf32>
    %c0_13 = arith.constant 0 : index
    %c0_14 = arith.constant 0 : index
    %35 = memref.load %arg5[%c0_13, %c0_14] : memref<1x1xf32, #tpu.memory_space<smem>>
    %36 = arith.addf %35, %34 : f32
    %c0_15 = arith.constant 0 : index
    %c0_16 = arith.constant 0 : index
    %37 = memref.load %arg5[%c0_15, %c0_16] : memref<1x1xf32, #tpu.memory_space<smem>>
    memref.store %36, %arg5[%c0_15, %c0_16] : memref<1x1xf32, #tpu.memory_space<smem>>
    return
  }
  func.func @transform_0(%arg0: i32, %arg1: i32) -> (i32, i32) {
    %c0_i32 = arith.constant 0 : i32
    %c0_i32_0 = arith.constant 0 : i32
    %c0_i32_1 = arith.constant 0 : i32
    return %c0_i32, %c0_i32_0 : i32, i32
  }
  func.func @transform_1(%arg0: i32, %arg1: i32) -> (i32, i32) {
    %c2_i32 = arith.constant 2 : i32
    %0 = arith.muli %arg0, %c2_i32 : i32
    %1 = arith.addi %0, %arg1 : i32
    %c0_i32 = arith.constant 0 : i32
    %c0_i32_0 = arith.constant 0 : i32
    return %c0_i32, %1 : i32, i32
  }
  func.func @transform_2(%arg0: i32, %arg1: i32) -> (i32, i32) {
    %c2_i32 = arith.constant 2 : i32
    %0 = arith.muli %arg0, %c2_i32 : i32
    %1 = arith.addi %0, %arg1 : i32
    %c0_i32 = arith.constant 0 : i32
    %c0_i32_0 = arith.constant 0 : i32
    return %c0_i32, %1 : i32, i32
  }
  func.func @transform_3(%arg0: i32, %arg1: i32) -> (i32, i32) {
    %c0_i32 = arith.constant 0 : i32
    %c0_i32_0 = arith.constant 0 : i32
    return %arg0, %c0_i32 : i32, i32
  }
}

</mosaic_0001>

<llo_original>
// kernel: tpu_custom_call.1
$region0: #{tpu_custom_call.1}
  #allocation0 [shape = 'u32[]', space=smem, size = 0x4, offset = 0x4, fixed_abs, tag = 'smem constant byte address 0x4 - core index']
  #allocation1 [shape = 'u32[72,128]{1,0:T(1,128)}', space=vmem, size = 0x9000, scoped, tag = 'internal scratch']
  %s0 = inlined_call_operand.vmem [shape: f32[32,8], index: 0, kind: input, shape index: {}]
  %s1 = inlined_call_operand.hbm [shape: f32[32,2048], index: 1, kind: input, shape index: {}]
  %s2 = inlined_call_operand.hbm [shape: f32[8,2048], index: 2, kind: input, shape index: {}]
  %s3 = inlined_call_operand.hbm [shape: f32[1,1], index: 3, kind: output, shape index: {}]
  %s4 = sld [smem:[#allocation0]]
  $region57: #{tpu_custom_call.1} parent=0
    _
  %s6 = ssub.s32 1, %s4
  %s7 = scalar_select 0, %s6, %s4
  $region1: #{tpu_custom_call.1} parent=0
    #allocation2 [shape = 'u8[262144]{0}', space=vmem, size = 0x40000, scoped, tag = 'input window, operand 1']
    #allocation3 [shape = 's32[2]{0}', space=sflag, size = 0x8, scoped, tag = 'scoped memory for tpu_custom_call.1']
    #allocation4 [shape = 's32[2]{0}', space=sflag, size = 0x8, scoped, tag = 'scoped memory for tpu_custom_call.1']
    #allocation5 [shape = 'u8[65536]{0}', space=vmem, size = 0x10000, scoped, tag = 'input window, operand 2']
    #allocation6 [shape = 's32[2]{0}', space=sflag, size = 0x8, scoped, tag = 'scoped memory for tpu_custom_call.1']
    #allocation7 [shape = 'u8[512]{0}', space=smem, size = 0x200, scoped, tag = 'output window, operand 0, single buffered']
    %8 = vsyncpa [#allocation3], 0
    %s9 = scalar_lea.sflag [#allocation3], 1
    %10 = vsyncpa %s9, 0
    %11 = vsyncpa [#allocation6], 0
    %s12 = scalar_lea.sflag [#allocation6], 1
    %13 = vsyncpa %s12, 0
    %14 = vsyncpa [#allocation4], 0
    loop: start=0, step=1, limit=4
    $region2: #{tpu_custom_call.1} parent=1 // loop_pre_header
      _
    $region3: #{tpu_custom_call.1} parent=1 // loop_header
      %s16 = sphi 0, %s20
      %p17 = scmp.ge.s32.totalorder %s16, 4
      %s23 = sphi 0, %s35
      %s24 = sphi 0, %s31
      %s25 = sphi 0, %s23
      %s26 = sphi 0, %s24
      %s27 = sphi 0, %s25
      %s28 = sphi 0, %s26
      %s36 = sphi 0, %s36
      %s38 = sphi 0, %s36
      %s39 = sphi 0, %s38
      %s53 = sphi 0, %s39
      %s63 = sphi 0, %s65
      %s66 = sphi 0, %s63
      %s67 = sphi 0, %s66
      %s83 = sphi 0, %s67
      %s93 = sphi 0, %s95
      %s96 = sphi 0, %s93
      %s97 = sphi 0, %s96
      %s113 = sphi 0, %s97
      %s119 = sphi 0, %s121
      %s122 = sphi 0, %s119
      %s123 = sphi 0, %s122
      %s139 = sphi 0, %s123
    $region4: #{tpu_custom_call.1} parent=1 // loop_header_branch
      %19 = sbr.rel (%p17) target = $region8
    $region5: #{tpu_custom_call.1} parent=1 // loop_body
      %s21 = ssub.s32 %s16, 1
      %s22 = ssub.s32 %s16, 2
      %s29 = sadd.s32 1, %s24
      %p30 = scmp.ge.s32.totalorder %s29, 2
      %s31 = scalar_select %p30, 0, %s29
      %s32 = sadd.s32 1, %s23
      %s33 = scalar_select %p30, %s32, %s23
      %p34 = scmp.ge.s32.totalorder %s33, 1
      %s35 = scalar_select %p34, 0, %s33
      %s37 = sadd.s32 %s36, 1
      %p40 = scmp.eq.s32.totalorder %s16, 1
      %p41 = scmp.ne.s32.totalorder %s36, %s38
      %p42 = scmp.eq.s32.totalorder %s16, 0
      %p43 = por %p41, %p42
      %p44 = scmp.ne.s32.totalorder %s36, %s38
      %p45 = scmp.eq.s32.totalorder %s21, 1
      %p46 = por %p44, %p45
      %p47 = scmp.ne.s32.totalorder %s38, %s39
      %p48 = scmp.eq.s32.totalorder %s21, 0
      %p49 = por %p47, %p48
      %p50 = scmp.ne.s32.totalorder %s38, %s39
      %p51 = scmp.eq.s32.totalorder %s22, 1
      %p52 = por %p50, %p51
      %p54 = scmp.ne.s32.totalorder %s39, %s53
      %p55 = scmp.eq.s32.totalorder %s22, 0
      %p56 = por %p54, %p55
      %s57 = smul.u32 %s23, 2
      %s58 = sadd.s32 %s57, %s24
      %s59 = smul.u32 %s35, 2
      %s60 = sadd.s32 %s59, %s31
      %s61 = ssub.s32 %s58, %s60
      %p62 = scmp.eq.s32.totalorder %s61, 0
      %s64 = sadd.s32 %s63, 1
      %s65 = scalar_select %p62, %s63, %s64
      %p68 = pneg %p62
      %p69 = scmp.eq.s32.totalorder %s16, 1
      %p70 = por %p68, %p69
      %p71 = scmp.ne.s32.totalorder %s63, %s66
      %p72 = scmp.eq.s32.totalorder %s16, 0
      %p73 = por %p71, %p72
      %p74 = scmp.ne.s32.totalorder %s63, %s66
      %p75 = scmp.eq.s32.totalorder %s21, 1
      %p76 = por %p74, %p75
      %p77 = scmp.ne.s32.totalorder %s66, %s67
      %p78 = scmp.eq.s32.totalorder %s21, 0
      %p79 = por %p77, %p78
      %p80 = scmp.ne.s32.totalorder %s66, %s67
      %p81 = scmp.eq.s32.totalorder %s22, 1
      %p82 = por %p80, %p81
      %p84 = scmp.ne.s32.totalorder %s67, %s83
      %p85 = scmp.eq.s32.totalorder %s22, 0
      %p86 = por %p84, %p85
      %s87 = smul.u32 %s23, 2
      %s88 = sadd.s32 %s87, %s24
      %s89 = smul.u32 %s35, 2
      %s90 = sadd.s32 %s89, %s31
      %s91 = ssub.s32 %s88, %s90
      %p92 = scmp.eq.s32.totalorder %s91, 0
      %s94 = sadd.s32 %s93, 1
      %s95 = scalar_select %p92, %s93, %s94
      %p98 = pneg %p92
      %p99 = scmp.eq.s32.totalorder %s16, 1
      %p100 = por %p98, %p99
      %p101 = scmp.ne.s32.totalorder %s93, %s96
      %p102 = scmp.eq.s32.totalorder %s16, 0
      %p103 = por %p101, %p102
      %p104 = scmp.ne.s32.totalorder %s93, %s96
      %p105 = scmp.eq.s32.totalorder %s21, 1
      %p106 = por %p104, %p105
      %p107 = scmp.ne.s32.totalorder %s96, %s97
      %p108 = scmp.eq.s32.totalorder %s21, 0
      %p109 = por %p107, %p108
      %p110 = scmp.ne.s32.totalorder %s96, %s97
      %p111 = scmp.eq.s32.totalorder %s22, 1
      %p112 = por %p110, %p111
      %p114 = scmp.ne.s32.totalorder %s97, %s113
      %p115 = scmp.eq.s32.totalorder %s22, 0
      %p116 = por %p114, %p115
      %s117 = ssub.s32 %s23, %s35
      %p118 = scmp.eq.s32.totalorder %s117, 0
      %s120 = sadd.s32 %s119, 1
      %s121 = scalar_select %p118, %s119, %s120
      %p124 = pneg %p118
      %p125 = scmp.eq.s32.totalorder %s16, 1
      %p126 = por %p124, %p125
      %p127 = scmp.ne.s32.totalorder %s119, %s122
      %p128 = scmp.eq.s32.totalorder %s16, 0
      %p129 = por %p127, %p128
      %p130 = scmp.ne.s32.totalorder %s119, %s122
      %p131 = scmp.eq.s32.totalorder %s21, 1
      %p132 = por %p130, %p131
      %p133 = scmp.ne.s32.totalorder %s122, %s123
      %p134 = scmp.eq.s32.totalorder %s21, 0
      %p135 = por %p133, %p134
      %p136 = scmp.ne.s32.totalorder %s122, %s123
      %p137 = scmp.eq.s32.totalorder %s22, 1
      %p138 = por %p136, %p137
      %p140 = scmp.ne.s32.totalorder %s123, %s139
      %p141 = scmp.eq.s32.totalorder %s22, 0
      %p142 = por %p140, %p141
      %p143 = scmp.le.s32.totalorder 1, %s16
      %p144 = scmp.lt.s32.totalorder %s16, 3
      %p145 = pnand %p143, %p144
      %p146 = pneg %p145
      // Predicated region
      $region9: #{tpu_custom_call.1} parent=5 // pred_check
        _
      $region10: #{tpu_custom_call.1} parent=5 // pred_check_branch
        %148 = sbr.rel (%p145) target = $region12
      $region11: #{tpu_custom_call.1} parent=5 // pred_region
        %s149 = ssub.s32 %s16, 1
        // Predicated region
        $region13: #{tpu_custom_call.1} parent=11 // pred_check
          %p150 = pneg %p49
        $region14: #{tpu_custom_call.1} parent=11 // pred_check_branch
          %152 = sbr.rel (%p150) target = $region16
        $region15: #{tpu_custom_call.1} parent=11 // pred_region
          _
        $region16: #{tpu_custom_call.1} parent=11 // pred_fallthru
          _
      $region12: #{tpu_custom_call.1} parent=5 // pred_fallthru
        _
      %p153 = scmp.lt.s32.totalorder %s16, 2
      // Predicated region
      $region17: #{tpu_custom_call.1} parent=5 // pred_check
        %p154 = pneg %p153
      $region18: #{tpu_custom_call.1} parent=5 // pred_check_branch
        %156 = sbr.rel (%p154) target = $region20
      $region19: #{tpu_custom_call.1} parent=5 // pred_region
        // Predicated region
        $region21: #{tpu_custom_call.1} parent=19 // pred_check
          %p157 = pneg %p73
        $region22: #{tpu_custom_call.1} parent=19 // pred_check_branch
          %159 = sbr.rel (%p157) target = $region24
        $region23: #{tpu_custom_call.1} parent=19 // pred_region
          %s160 = sand.u32 %s63, 1
          %s161 = scalar_lea.sflag [#allocation3], %s160
          %s162 = sand.u32 %s63, 1
          %s163 = smul.addr %s162, 256
          %s164 = scalar_lea.vmem [#allocation2], %s163
          %s165 = smul.u32 %s23, 2
          %s166 = sadd.s32 %s165, %s24
          %s167 = smul.u32 8, %s166
          %169 = vsyncadd %s161, 0
          %s170 = smul.addr %s167, 8
          %s171 = scalar_lea.hbm %s1, %s170
          %s172 = sshll.u32 %s171, 4
          %s173 = int_to_ptr.hbm [resolvable:$true] %s172
          %s174 = sshll.u32 %s164, 4
          %s175 = int_to_ptr.vmem [resolvable:$true] %s174
          %180 = dma.hbm_to_vmem [thread:$0]  %s173, 4096, %s175, %s161, 2048, 1024, 64
        $region24: #{tpu_custom_call.1} parent=19 // pred_fallthru
          _
        // Predicated region
        $region25: #{tpu_custom_call.1} parent=19 // pred_check
          %p181 = pneg %p103
        $region26: #{tpu_custom_call.1} parent=19 // pred_check_branch
          %183 = sbr.rel (%p181) target = $region28
        $region27: #{tpu_custom_call.1} parent=19 // pred_region
          %s184 = sand.u32 %s93, 1
          %s185 = scalar_lea.sflag [#allocation6], %s184
          %s186 = sand.u32 %s93, 1
          %s187 = smul.addr %s186, 64
          %s188 = scalar_lea.vmem [#allocation5], %s187
          %s189 = smul.u32 %s23, 2
          %s190 = sadd.s32 %s189, %s24
          %s191 = smul.u32 8, %s190
          %193 = vsyncadd %s185, 0
          %s194 = smul.addr %s191, 8
          %s195 = scalar_lea.hbm %s2, %s194
          %s197 = sshll.u32 %s195, 4
          %s198 = int_to_ptr.hbm [resolvable:$true] %s197
          %s199 = sshll.u32 %s188, 4
          %s200 = int_to_ptr.vmem [resolvable:$true] %s199
          %202 = dma.hbm_to_vmem [thread:$0]  %s198, 1024, %s200, %s185
        $region28: #{tpu_custom_call.1} parent=19 // pred_fallthru
          _
      $region20: #{tpu_custom_call.1} parent=5 // pred_fallthru
        _
      %p203 = scmp.le.s32.totalorder 1, %s16
      %p204 = scmp.lt.s32.totalorder %s16, 3
      %p205 = pnand %p203, %p204
      %p206 = pneg %p205
      // Predicated region
      $region29: #{tpu_custom_call.1} parent=5 // pred_check
        _
      $region30: #{tpu_custom_call.1} parent=5 // pred_check_branch
        %208 = sbr.rel (%p205) target = $region32
      $region31: #{tpu_custom_call.1} parent=5 // pred_region
        %s209 = ssub.s32 %s16, 1
        %s210 = sand.u32 %s66, 1
        %s211 = scalar_lea.sflag [#allocation3], %s210
        %s212 = sand.u32 %s66, 1
        %s213 = smul.addr %s212, 256
        %s214 = scalar_lea.vmem [#allocation2], %s213
        // Predicated region
        $region33: #{tpu_custom_call.1} parent=31 // pred_check
          %p215 = pneg %p79
        $region34: #{tpu_custom_call.1} parent=31 // pred_check_branch
          %217 = sbr.rel (%p215) target = $region36
        $region35: #{tpu_custom_call.1} parent=31 // pred_region
          %219 = dma.done %s211, 4096
        $region36: #{tpu_custom_call.1} parent=31 // pred_fallthru
          _
        %s220 = sand.u32 %s96, 1
        %s221 = scalar_lea.sflag [#allocation6], %s220
        %s222 = sand.u32 %s96, 1
        %s223 = smul.addr %s222, 64
        %s224 = scalar_lea.vmem [#allocation5], %s223
        // Predicated region
        $region37: #{tpu_custom_call.1} parent=31 // pred_check
          %p225 = pneg %p109
        $region38: #{tpu_custom_call.1} parent=31 // pred_check_branch
          %227 = sbr.rel (%p225) target = $region40
        $region39: #{tpu_custom_call.1} parent=31 // pred_region
          %229 = dma.done %s221, 1024
        $region40: #{tpu_custom_call.1} parent=31 // pred_fallthru
          _
        %p230 = pneg %p49
        %p231 = pneg %p46
        %s232 = sand.u32 %s66, 1
        %s233 = scalar_lea.sflag [#allocation3], %s232
        %s234 = sand.u32 %s66, 1
        %s235 = smul.addr %s234, 256
        %s236 = scalar_lea.vmem [#allocation2], %s235
        %p237 = pneg %p79
        %p238 = pneg %p76
        %s239 = sand.u32 %s96, 1
        %s240 = scalar_lea.sflag [#allocation6], %s239
        %s241 = sand.u32 %s96, 1
        %s242 = smul.addr %s241, 64
        %s243 = scalar_lea.vmem [#allocation5], %s242
        %p244 = pneg %p109
        %p245 = pneg %p106
        %p246 = pneg %p135
        %p247 = pneg %p132
        %s248 = smul.u32 %s25, 2
        %s249 = sadd.s32 %s248, %s26
        %s250 = smul.u32 8, %s249
        %s251 = smul.u32 %s25, 2
        %s252 = sadd.s32 %s251, %s26
        %s253 = smul.u32 8, %s252
        %p254 = scmp.eq.s32.totalorder %s26, 0
        // Predicated region
        $region41: #{tpu_custom_call.1} parent=31 // pred_check
          %p255 = pneg %p254
        $region42: #{tpu_custom_call.1} parent=31 // pred_check_branch
          %257 = sbr.rel (%p255) target = $region44
        $region43: #{tpu_custom_call.1} parent=31 // pred_region
          %s258 = scalar_lea.smem [#allocation7], 0
          %259 = sst [smem:[%s258]] 0.0
        $region44: #{tpu_custom_call.1} parent=31 // pred_fallthru
          _
        %v260 = vld [vmem:[%s0] sm:$0xff]
        %v261 = vld [vmem:[%s0 + $0x8] sm:$0xff]
        %v262 = vld [vmem:[%s0 + $0x10] sm:$0xff]
        %v263 = vld [vmem:[%s0 + $0x18] sm:$0xff]
        %v264 = vmul.f32 %v260, 0.5
        %v265 = vmul.f32 %v261, 0.5
        %v266 = vmul.f32 %v262, 0.5
        %v267 = vmul.f32 %v263, 0.5
        %v268 = vld [vmem:[%s214] sm:$0xff]
        %v269 = vld [vmem:[%s214 + $0x8] sm:$0xff]
        %v270 = vld [vmem:[%s214 + $0x10] sm:$0xff]
        %v271 = vld [vmem:[%s214 + $0x18] sm:$0xff]
        %v272 = vld [vmem:[%s214 + $0x20] sm:$0xff]
        %v273 = vld [vmem:[%s214 + $0x28] sm:$0xff]
        %v274 = vld [vmem:[%s214 + $0x30] sm:$0xff]
        %v275 = vld [vmem:[%s214 + $0x38] sm:$0xff]
        %v276 = vld [vmem:[%s214 + $0x40] sm:$0xff]
        %v277 = vld [vmem:[%s214 + $0x48] sm:$0xff]
        %v278 = vld [vmem:[%s214 + $0x50] sm:$0xff]
        %v279 = vld [vmem:[%s214 + $0x58] sm:$0xff]
        %v280 = vld [vmem:[%s214 + $0x60] sm:$0xff]
        %v281 = vld [vmem:[%s214 + $0x68] sm:$0xff]
        %v282 = vld [vmem:[%s214 + $0x70] sm:$0xff]
        %v283 = vld [vmem:[%s214 + $0x78] sm:$0xff]
        %v284 = vld [vmem:[%s214 + $0x80] sm:$0xff]
        %v285 = vld [vmem:[%s214 + $0x88] sm:$0xff]
        %v286 = vld [vmem:[%s214 + $0x90] sm:$0xff]
        %v287 = vld [vmem:[%s214 + $0x98] sm:$0xff]
        %v288 = vld [vmem:[%s214 + $0xa0] sm:$0xff]
        %v289 = vld [vmem:[%s214 + $0xa8] sm:$0xff]
        %v290 = vld [vmem:[%s214 + $0xb0] sm:$0xff]
        %v291 = vld [vmem:[%s214 + $0xb8] sm:$0xff]
        %v292 = vld [vmem:[%s214 + $0xc0] sm:$0xff]
        %v293 = vld [vmem:[%s214 + $0xc8] sm:$0xff]
        %v294 = vld [vmem:[%s214 + $0xd0] sm:$0xff]
        %v295 = vld [vmem:[%s214 + $0xd8] sm:$0xff]
        %v296 = vld [vmem:[%s214 + $0xe0] sm:$0xff]
        %v297 = vld [vmem:[%s214 + $0xe8] sm:$0xff]
        %v298 = vld [vmem:[%s214 + $0xf0] sm:$0xff]
        %v299 = vld [vmem:[%s214 + $0xf8] sm:$0xff]
        %v300 = vld [vmem:[%s224] sm:$0xff]
        %v301 = vld [vmem:[%s224 + $0x8] sm:$0xff]
        %v302 = vld [vmem:[%s224 + $0x10] sm:$0xff]
        %v303 = vld [vmem:[%s224 + $0x18] sm:$0xff]
        %v304 = vld [vmem:[%s224 + $0x20] sm:$0xff]
        %v305 = vld [vmem:[%s224 + $0x28] sm:$0xff]
        %v306 = vld [vmem:[%s224 + $0x30] sm:$0xff]
        %v307 = vld [vmem:[%s224 + $0x38] sm:$0xff]
        %308 = vxpose.xlu0.b32.start [1/16] %v264, 128
        %309 = vxpose.xlu0.b32.cont [2/16] %v265, 128
        %310 = vxpose.xlu0.b32.cont [3/16] %v266, 128
        %311 = vxpose.xlu0.b32.cont [4/16] %v267, 128
        %312 = vxpose.xlu0.b32.cont [5/16] 0.0, 128
        %313 = vxpose.xlu0.b32.cont [6/16] 0.0, 128
        %314 = vxpose.xlu0.b32.cont [7/16] 0.0, 128
        %315 = vxpose.xlu0.b32.cont [8/16] 0.0, 128
        %316 = vxpose.xlu0.b32.cont [9/16] 0.0, 128
        %317 = vxpose.xlu0.b32.cont [10/16] 0.0, 128
        %318 = vxpose.xlu0.b32.cont [11/16] 0.0, 128
        %319 = vxpose.xlu0.b32.cont [12/16] 0.0, 128
        %320 = vxpose.xlu0.b32.cont [13/16] 0.0, 128
        %321 = vxpose.xlu0.b32.cont [14/16] 0.0, 128
        %322 = vxpose.xlu0.b32.cont [15/16] 0.0, 128
        %323 = vxpose.xlu0.b32.end [16/16] 0.0, 128
        %v324 = vpop.trf.xlu0
        %v325 = vpop.trf.xlu0
        %v326 = vpop.trf.xlu0
        %v327 = vpop.trf.xlu0
        %v328 = vpop.trf.xlu0
        %v329 = vpop.trf.xlu0
        %v330 = vpop.trf.xlu0
        %v331 = vpop.trf.xlu0
        %v332 = vpop.trf.xlu0
        %v333 = vpop.trf.xlu0
        %v334 = vpop.trf.xlu0
        %v335 = vpop.trf.xlu0
        %v336 = vpop.trf.xlu0
        %v337 = vpop.trf.xlu0
        %v338 = vpop.trf.xlu0
        %v339 = vpop.trf.xlu0
        %vm340 = vcmask 261120
        %v342 = vsel %vm340, %v324, 0
        %344 = vmatpush.msra.mxu0 0.0
        %345 = vmatpush.msra.mxu0 0.0
        %346 = vmatpush.msra.mxu0 0.0
        %347 = vmatpush.msra.mxu0 0.0
        %348 = vmatpush.msra.mxu0 0.0
        %349 = vmatpush.msra.mxu0 0.0
        %350 = vmatpush.msra.mxu0 0.0
        %351 = vmatpush.msra.mxu0 0.0
        %352 = vmatpush.msra.mxu0 0.0
        %353 = vmatpush.msra.mxu0 0.0
        %354 = vmatpush.msra.mxu0 0.0
        %355 = vmatpush.msra.mxu0 0.0
        %356 = vmatpush.msra.mxu0 %v292
        %357 = vmatpush.msra.mxu0 %v284
        %358 = vmatpush.msra.mxu0 %v276
        %359 = vmatpush.msra.mxu0 %v268
        %360 = vmatmul.f32.gmra.mxu0 %v342
        %v361 = vpop.f32.mrf.mxu0
        %v362 = vadd.f32 0.0, %v361
        %363 = vdwg.mxu0
        %364 = vmatpush.msra.mxu0 0.0
        %365 = vmatpush.msra.mxu0 0.0
        %366 = vmatpush.msra.mxu0 0.0
        %367 = vmatpush.msra.mxu0 0.0
        %368 = vmatpush.msra.mxu0 0.0
        %369 = vmatpush.msra.mxu0 0.0
        %370 = vmatpush.msra.mxu0 0.0
        %371 = vmatpush.msra.mxu0 0.0
        %372 = vmatpush.msra.mxu0 0.0
        %373 = vmatpush.msra.mxu0 0.0
        %374 = vmatpush.msra.mxu0 0.0
        %375 = vmatpush.msra.mxu0 0.0
        %376 = vmatpush.msra.mxu0 %v293
        %377 = vmatpush.msra.mxu0 %v285
        %378 = vmatpush.msra.mxu0 %v277
        %379 = vmatpush.msra.mxu0 %v269
        %380 = vmatmul.f32.gmra.mxu0 %v342
        %v381 = vpop.f32.mrf.mxu0
        %v382 = vadd.f32 0.0, %v381
        %383 = vdwg.mxu0
        %384 = vmatpush.msra.mxu0 0.0
        %385 = vmatpush.msra.mxu0 0.0
        %386 = vmatpush.msra.mxu0 0.0
        %387 = vmatpush.msra.mxu0 0.0
        %388 = vmatpush.msra.mxu0 0.0
        %389 = vmatpush.msra.mxu0 0.0
        %390 = vmatpush.msra.mxu0 0.0
        %391 = vmatpush.msra.mxu0 0.0
        %392 = vmatpush.msra.mxu0 0.0
        %393 = vmatpush.msra.mxu0 0.0
        %394 = vmatpush.msra.mxu0 0.0
        %395 = vmatpush.msra.mxu0 0.0
        %396 = vmatpush.msra.mxu0 %v294
        %397 = vmatpush.msra.mxu0 %v286
        %398 = vmatpush.msra.mxu0 %v278
        %399 = vmatpush.msra.mxu0 %v270
        %400 = vmatmul.f32.gmra.mxu0 %v342
        %v401 = vpop.f32.mrf.mxu0
        %v402 = vadd.f32 0.0, %v401
        %403 = vdwg.mxu0
        %404 = vmatpush.msra.mxu0 0.0
        %405 = vmatpush.msra.mxu0 0.0
        %406 = vmatpush.msra.mxu0 0.0
        %407 = vmatpush.msra.mxu0 0.0
        %408 = vmatpush.msra.mxu0 0.0
        %409 = vmatpush.msra.mxu0 0.0
        %410 = vmatpush.msra.mxu0 0.0
        %411 = vmatpush.msra.mxu0 0.0
        %412 = vmatpush.msra.mxu0 0.0
        %413 = vmatpush.msra.mxu0 0.0
        %414 = vmatpush.msra.mxu0 0.0
        %415 = vmatpush.msra.mxu0 0.0
        %416 = vmatpush.msra.mxu0 %v295
        %417 = vmatpush.msra.mxu0 %v287
        %418 = vmatpush.msra.mxu0 %v279
        %419 = vmatpush.msra.mxu0 %v271
        %420 = vmatmul.f32.gmra.mxu0 %v342
        %v421 = vpop.f32.mrf.mxu0
        %v422 = vadd.f32 0.0, %v421
        %423 = vdwg.mxu0
        %424 = vmatpush.msra.mxu0 0.0
        %425 = vmatpush.msra.mxu0 0.0
        %426 = vmatpush.msra.mxu0 0.0
        %427 = vmatpush.msra.mxu0 0.0
        %428 = vmatpush.msra.mxu0 0.0
        %429 = vmatpush.msra.mxu0 0.0
        %430 = vmatpush.msra.mxu0 0.0
        %431 = vmatpush.msra.mxu0 0.0
        %432 = vmatpush.msra.mxu0 0.0
        %433 = vmatpush.msra.mxu0 0.0
        %434 = vmatpush.msra.mxu0 0.0
        %435 = vmatpush.msra.mxu0 0.0
        %436 = vmatpush.msra.mxu0 %v296
        %437 = vmatpush.msra.mxu0 %v288
        %438 = vmatpush.msra.mxu0 %v280
        %439 = vmatpush.msra.mxu0 %v272
        %440 = vmatmul.f32.gmra.mxu0 %v342
        %v441 = vpop.f32.mrf.mxu0
        %v442 = vadd.f32 0.0, %v441
        %443 = vdwg.mxu0
        %444 = vmatpush.msra.mxu0 0.0
        %445 = vmatpush.msra.mxu0 0.0
        %446 = vmatpush.msra.mxu0 0.0
        %447 = vmatpush.msra.mxu0 0.0
        %448 = vmatpush.msra.mxu0 0.0
        %449 = vmatpush.msra.mxu0 0.0
        %450 = vmatpush.msra.mxu0 0.0
        %451 = vmatpush.msra.mxu0 0.0
        %452 = vmatpush.msra.mxu0 0.0
        %453 = vmatpush.msra.mxu0 0.0
        %454 = vmatpush.msra.mxu0 0.0
        %455 = vmatpush.msra.mxu0 0.0
        %456 = vmatpush.msra.mxu0 %v297
        %457 = vmatpush.msra.mxu0 %v289
        %458 = vmatpush.msra.mxu0 %v281
        %459 = vmatpush.msra.mxu0 %v273
        %460 = vmatmul.f32.gmra.mxu0 %v342
        %v461 = vpop.f32.mrf.mxu0
        %v462 = vadd.f32 0.0, %v461
        %463 = vdwg.mxu0
        %464 = vmatpush.msra.mxu0 0.0
        %465 = vmatpush.msra.mxu0 0.0
        %466 = vmatpush.msra.mxu0 0.0
        %467 = vmatpush.msra.mxu0 0.0
        %468 = vmatpush.msra.mxu0 0.0
        %469 = vmatpush.msra.mxu0 0.0
        %470 = vmatpush.msra.mxu0 0.0
        %471 = vmatpush.msra.mxu0 0.0
        %472 = vmatpush.msra.mxu0 0.0
        %473 = vmatpush.msra.mxu0 0.0
        %474 = vmatpush.msra.mxu0 0.0
        %475 = vmatpush.msra.mxu0 0.0
        %476 = vmatpush.msra.mxu0 %v298
        %477 = vmatpush.msra.mxu0 %v290
        %478 = vmatpush.msra.mxu0 %v282
        %479 = vmatpush.msra.mxu0 %v274
        %480 = vmatmul.f32.gmra.mxu0 %v342
        %v481 = vpop.f32.mrf.mxu0
        %v482 = vadd.f32 0.0, %v481
        %483 = vdwg.mxu0
        %484 = vmatpush.msra.mxu0 0.0
        %485 = vmatpush.msra.mxu0 0.0
        %486 = vmatpush.msra.mxu0 0.0
        %487 = vmatpush.msra.mxu0 0.0
        %488 = vmatpush.msra.mxu0 0.0
        %489 = vmatpush.msra.mxu0 0.0
        %490 = vmatpush.msra.mxu0 0.0
        %491 = vmatpush.msra.mxu0 0.0
        %492 = vmatpush.msra.mxu0 0.0
        %493 = vmatpush.msra.mxu0 0.0
        %494 = vmatpush.msra.mxu0 0.0
        %495 = vmatpush.msra.mxu0 0.0
        %496 = vmatpush.msra.mxu0 %v299
        %497 = vmatpush.msra.mxu0 %v291
        %498 = vmatpush.msra.mxu0 %v283
        %499 = vmatpush.msra.mxu0 %v275
        %500 = vmatmul.f32.gmra.mxu0 %v342
        %v501 = vpop.f32.mrf.mxu0
        %v502 = vadd.f32 0.0, %v501
        %503 = vdwg.mxu0
        %v504 = vmax.f32 %v362, -100.0
        %v505 = vmax.f32 %v382, -100.0
        %v506 = vmax.f32 %v402, -100.0
        %v507 = vmax.f32 %v422, -100.0
        %v508 = vmax.f32 %v442, -100.0
        %v509 = vmax.f32 %v462, -100.0
        %v510 = vmax.f32 %v482, -100.0
        %v511 = vmax.f32 %v502, -100.0
        %v512 = vmin.f32 %v504, 50.0
        %v513 = vmin.f32 %v505, 50.0
        %v514 = vmin.f32 %v506, 50.0
        %v515 = vmin.f32 %v507, 50.0
        %v516 = vmin.f32 %v508, 50.0
        %v517 = vmin.f32 %v509, 50.0
        %v518 = vmin.f32 %v510, 50.0
        %v519 = vmin.f32 %v511, 50.0
        %v520 = vmul.f32 %v512, 1.442695
        %v521 = vpow.pop %v520
        %v522 = vmul.f32 %v513, 1.442695
        %v523 = vpow.pop %v522
        %v524 = vmul.f32 %v514, 1.442695
        %v525 = vpow.pop %v524
        %v526 = vmul.f32 %v515, 1.442695
        %v527 = vpow.pop %v526
        %v528 = vmul.f32 %v516, 1.442695
        %v529 = vpow.pop %v528
        %v530 = vmul.f32 %v517, 1.442695
        %v531 = vpow.pop %v530
        %v532 = vmul.f32 %v518, 1.442695
        %v533 = vpow.pop %v532
        %v534 = vmul.f32 %v519, 1.442695
        %v535 = vpow.pop %v534
        %v536 = vadd.f32 %v521, 1.0
        %v537 = vadd.f32 %v523, 1.0
        %v538 = vadd.f32 %v525, 1.0
        %v539 = vadd.f32 %v527, 1.0
        %v540 = vadd.f32 %v529, 1.0
        %v541 = vadd.f32 %v531, 1.0
        %v542 = vadd.f32 %v533, 1.0
        %v543 = vadd.f32 %v535, 1.0
        %v544 = vlog2.pop %v536
        %v545 = vmul.f32 %v544, 0.6931472
        %v546 = vlog2.pop %v537
        %v547 = vmul.f32 %v546, 0.6931472
        %v548 = vlog2.pop %v538
        %v549 = vmul.f32 %v548, 0.6931472
        %v550 = vlog2.pop %v539
        %v551 = vmul.f32 %v550, 0.6931472
        %v552 = vlog2.pop %v540
        %v553 = vmul.f32 %v552, 0.6931472
        %v554 = vlog2.pop %v541
        %v555 = vmul.f32 %v554, 0.6931472
        %v556 = vlog2.pop %v542
        %v557 = vmul.f32 %v556, 0.6931472
        %v558 = vlog2.pop %v543
        %v559 = vmul.f32 %v558, 0.6931472
        %v560 = vmul.f32 %v300, %v512
        %v561 = vmul.f32 %v301, %v513
        %v562 = vmul.f32 %v302, %v514
        %v563 = vmul.f32 %v303, %v515
        %v564 = vmul.f32 %v304, %v516
        %v565 = vmul.f32 %v305, %v517
        %v566 = vmul.f32 %v306, %v518
        %v567 = vmul.f32 %v307, %v519
        %v568 = vsub.f32 %v545, %v560
        %v569 = vsub.f32 %v547, %v561
        %v570 = vsub.f32 %v549, %v562
        %v571 = vsub.f32 %v551, %v563
        %v572 = vsub.f32 %v553, %v564
        %v573 = vsub.f32 %v555, %v565
        %v574 = vsub.f32 %v557, %v566
        %v575 = vsub.f32 %v559, %v567
        %s576 = smul.u32 %s25, 2
        %s577 = sadd.s32 %s576, %s26
        %s578 = smul.u32 %s577, 1024
        %v579 = vlaneseq
        %v580 = vand.u32 %v579, 127
        %v581 = vadd.s32 %v580, 128
        %v582 = vadd.s32 %v580, 256
        %v583 = vadd.s32 %v580, 384
        %v584 = vadd.s32 %v580, 512
        %v585 = vadd.s32 %v580, 640
        %v586 = vadd.s32 %v580, 768
        %v587 = vadd.s32 %v580, 896
        %v588 = vstv %s578
        %v589 = vadd.s32 %v588, %v580
        %v590 = vadd.s32 %v588, %v581
        %v591 = vadd.s32 %v588, %v582
        %v592 = vadd.s32 %v588, %v583
        %v593 = vadd.s32 %v588, %v584
        %v594 = vadd.s32 %v588, %v585
        %v595 = vadd.s32 %v588, %v586
        %v596 = vadd.s32 %v588, %v587
        %vm597 = vcmp.lt.s32.totalorder %v589, 2000
        %vm598 = vcmp.lt.s32.totalorder %v590, 2000
        %vm599 = vcmp.lt.s32.totalorder %v591, 2000
        %vm600 = vcmp.lt.s32.totalorder %v592, 2000
        %vm601 = vcmp.lt.s32.totalorder %v593, 2000
        %vm602 = vcmp.lt.s32.totalorder %v594, 2000
        %vm603 = vcmp.lt.s32.totalorder %v595, 2000
        %vm604 = vcmp.lt.s32.totalorder %v596, 2000
        %v605 = vsel %vm597, %v568, 0.0
        %v606 = vsel %vm598, %v569, 0.0
        %v607 = vsel %vm599, %v570, 0.0
        %v608 = vsel %vm600, %v571, 0.0
        %v609 = vsel %vm601, %v572, 0.0
        %v610 = vsel %vm602, %v573, 0.0
        %v611 = vsel %vm603, %v574, 0.0
        %v612 = vsel %vm604, %v575, 0.0
        %v613 = vadd.f32 %v605, %v606
        %v614 = vadd.f32 %v613, %v607
        %v615 = vadd.f32 %v614, %v608
        %v616 = vadd.f32 %v615, %v609
        %v617 = vadd.f32 %v616, %v610
        %v618 = vadd.f32 %v617, %v611
        %v619 = vadd.f32 %v618, %v612
        %620 = vadd.xlane.f32.xlu0 %v619
        %v621 = vpop.xlane.xlu0 %620
        %vm622 = vcmask 7168
        %v623 = vsel %vm622, %v621, 0.0
        %624 = vadd.xlane.f32.xlu0 %v623
        %v625 = vpop.xlane.xlu0 %624
        %v626 = vrot.slane %v625, 4
        %v627 = vadd.f32 %v625, %v626
        %v628 = vrot.slane %v627, 2
        %v629 = vadd.f32 %v627, %v628
        %v630 = vrot.slane %v629, 1
        %v631 = vadd.f32 %v629, %v630
        %s632 = vtos %v631
        %s633 = sld [smem:[#allocation7]]
        %s634 = sadd.f32 %s633, %s632
        %s635 = scalar_lea.smem [#allocation7], 0
        %636 = sst [smem:[%s635]] %s634
        // Predicated region
        $region45: #{tpu_custom_call.1} parent=31 // pred_check
          %p637 = pneg %p132
        $region46: #{tpu_custom_call.1} parent=31 // pred_check_branch
          %639 = sbr.rel (%p637) target = $region48
        $region47: #{tpu_custom_call.1} parent=31 // pred_region
          %641 = vsyncadd [#allocation4], 0
          %s642 = scalar_lea.hbm %s3, %s25
          %s644 = sshll.u32 %s642, 4
          %s645 = int_to_ptr.hbm [resolvable:$true] %s644
          %647 = dma.smem_to_hbm [#allocation7], 16, %s645, [#allocation4]
        $region48: #{tpu_custom_call.1} parent=31 // pred_fallthru
          _
        // Predicated region
        $region49: #{tpu_custom_call.1} parent=31 // pred_check
          %p648 = pneg %p132
        $region50: #{tpu_custom_call.1} parent=31 // pred_check_branch
          %650 = sbr.rel (%p648) target = $region52
        $region51: #{tpu_custom_call.1} parent=31 // pred_region
          %652 = dma.done [#allocation4], 16
        $region52: #{tpu_custom_call.1} parent=31 // pred_fallthru
          _
        %653 = sfence
      $region32: #{tpu_custom_call.1} parent=5 // pred_fallthru
        _
      %p654 = scmp.le.s32.totalorder 2, %s16
      // Predicated region
      $region53: #{tpu_custom_call.1} parent=5 // pred_check
        %p655 = pneg %p654
      $region54: #{tpu_custom_call.1} parent=5 // pred_check_branch
        %657 = sbr.rel (%p655) target = $region56
      $region55: #{tpu_custom_call.1} parent=5 // pred_region
        %s658 = ssub.s32 %s16, 2
      $region56: #{tpu_custom_call.1} parent=5 // pred_fallthru
        _
    $region6: #{tpu_custom_call.1} parent=1 // loop_footer
      %s20 = sadd.s32 1, %s16
    $region7: #{tpu_custom_call.1} parent=1 // loop_footer_branch
      %15 = sbr.rel target = $region3
    $region8: #{tpu_custom_call.1} parent=1 // loop_exit
      _
    %659 = vsyncpa [#allocation3], 1
    %s660 = scalar_lea.sflag [#allocation3], 1
    %661 = vsyncpa %s660, 1
    %662 = vsyncpa [#allocation6], 1
    %s663 = scalar_lea.sflag [#allocation6], 1
    %664 = vsyncpa %s663, 1
    %665 = vsyncpa [#allocation4], 1
    %s666 = scalar_lea.sflag [#allocation4], 1
    %667 = vsyncpa %s666, 1

</llo_original>
